<compile_context>
chip_gen: v5e
topology: v5e:2x2
jax: 0.10.0
libtpu: 0.0.40
codegen_flags: <defaults>
</compile_context>

<pallas_src>
import jax
import jax.numpy as jnp
from jax.experimental import pallas as pl
from jax.experimental.pallas import tpu as pltpu


# -----------------------------------------------------------------------------
# Primary path: Identity.forward(x) = x.  The best kernel is no kernel.
# -----------------------------------------------------------------------------
def identity(x):
    """Identity.forward(x) = x — no pallas_call, no launch, no fusion barrier."""
    return x


# -----------------------------------------------------------------------------
# Materializing-copy path: direct HBM -> HBM DMA (zero VMEM, zero vld/vst).
# -----------------------------------------------------------------------------
def _make_hbm_copy_kernel(chunk_starts, chunk_sizes):
    """Build a kernel that copies x -> o entirely with async HBM->HBM DMAs.

    The chunk boundaries are static Python ints (closed over), so each DMA is
    a statically-shaped slice along the leading axis.  All DMAs are started
    before any wait, so they overlap on the DMA engines.
    """
    n_chunks = len(chunk_starts)

    def kernel(x_hbm, o_hbm, sems):
        if n_chunks == 1:
            cp = pltpu.make_async_copy(x_hbm, o_hbm, sems.at[0])
            cp.start()
            cp.wait()
            return
        copies = []
        for c in range(n_chunks):
            s, sz = chunk_starts[c], chunk_sizes[c]
            cp = pltpu.make_async_copy(
                x_hbm.at[pl.ds(s, sz)],
                o_hbm.at[pl.ds(s, sz)],
                sems.at[c],
            )
            cp.start()
            copies.append(cp)
        for cp in copies:
            cp.wait()

    return kernel


def identity_copy(x, *, max_chunks=4, min_chunk_bytes=1 << 20):
    """Return a freshly materialized copy of x via direct HBM->HBM DMA.

    Small arrays use a single DMA; large arrays split the leading dim into up
    to `max_chunks` DMAs (>= ~1 MiB each) started back-to-back for overlap.
    """
    if x.size == 0:
        # Zero-element array: nothing to DMA; still hand back a fresh array.
        return jnp.copy(x)

    # 0-D scalars have no axis to slice/DMA over; (1,) reshape is metadata-only.
    orig_shape = x.shape
    x2 = x.reshape(1) if x.ndim == 0 else x

    rows = x2.shape[0]
    total_bytes = x2.size * jnp.dtype(x2.dtype).itemsize

    # Pick a small static chunk count: 1 for small copies, up to max_chunks
    # once the payload is large enough to benefit from overlapping DMAs.
    n_chunks = int(max(1, min(max_chunks, rows, total_bytes // min_chunk_bytes)))

    base, rem = divmod(rows, n_chunks)
    chunk_sizes, chunk_starts, start = [], [], 0
    for c in range(n_chunks):
        sz = base + (1 if c < rem else 0)
        chunk_sizes.append(sz)
        chunk_starts.append(start)
        start += sz

    out = pl.pallas_call(
        _make_hbm_copy_kernel(tuple(chunk_starts), tuple(chunk_sizes)),
        out_shape=jax.ShapeDtypeStruct(x2.shape, x2.dtype),
        in_specs=[pl.BlockSpec(memory_space=pl.ANY)],   # raw HBM ref, no auto-DMA
        out_specs=pl.BlockSpec(memory_space=pl.ANY),    # raw HBM ref, no auto-DMA
        scratch_shapes=[pltpu.SemaphoreType.DMA((n_chunks,))],
    )(x2)

    return out.reshape(orig_shape) if out.shape != orig_shape else out


if __name__ == "__main__":
    key = jax.random.PRNGKey(0)
    # NCHW input, consistent with a conv-style pipeline feeding Identity.
    x = jax.random.normal(key, (2, 4, 16, 16), dtype=jnp.float32)

    # Primary (no-op) path.
    y = identity(x)
    jax.block_until_ready(y)
    assert y.shape == x.shape and y.dtype == x.dtype
    assert bool(jnp.all(y == x))

    # Materializing-copy path (the Pallas HBM->HBM DMA kernel).
    y2 = identity_copy(x)
    jax.block_until_ready(y2)
    assert y2.shape == x.shape and y2.dtype == x.dtype
    assert bool(jnp.all(y2 == x))

    # Awkward (non-128-multiple) size: previously a robustness hole, now fine
    # because the DMA path has no (8,128) tiling constraint.
    x_odd = jax.random.normal(jax.random.PRNGKey(1), (3, 5, 7), dtype=jnp.float32)
    y3 = identity_copy(x_odd)
    jax.block_until_ready(y3)
    assert y3.shape == x_odd.shape and bool(jnp.all(y3 == x_odd))

    print("KERNEL_OK")
</pallas_src>

<mosaic_0001>
module attributes {stable_mosaic.version = 11 : i64} {
  func.func @kernel(%arg0: memref<2x4x16x16xf32, #tpu.memory_space<any>>, %arg1: memref<2x4x16x16xf32, #tpu.memory_space<any>>, %arg2: memref<1x!tpu.dma_semaphore, #tpu.memory_space<semaphore_mem>>) attributes {dimension_semantics = [], scalar_prefetch = 0 : i64, scratch_operands = 1 : i64, tpu.core_type = #tpu.core_type<tc>} {
    %c0_i32 = arith.constant 0 : i32
    %0 = tpu.memref_slice %arg2[%c0_i32] : memref<1x!tpu.dma_semaphore, #tpu.memory_space<semaphore_mem>> -> memref<1x!tpu.dma_semaphore, #tpu.memory_space<semaphore_mem>>
    %1 = tpu.memref_squeeze %0 : memref<1x!tpu.dma_semaphore, #tpu.memory_space<semaphore_mem>> -> memref<!tpu.dma_semaphore, #tpu.memory_space<semaphore_mem>>
    tpu.enqueue_dma source(%arg0 : memref<2x4x16x16xf32, #tpu.memory_space<any>>) target(%arg1 : memref<2x4x16x16xf32, #tpu.memory_space<any>>) target_semaphore(%1 : memref<!tpu.dma_semaphore, #tpu.memory_space<semaphore_mem>>)
    %c0_i32_0 = arith.constant 0 : i32
    %2 = tpu.memref_slice %arg2[%c0_i32_0] : memref<1x!tpu.dma_semaphore, #tpu.memory_space<semaphore_mem>> -> memref<1x!tpu.dma_semaphore, #tpu.memory_space<semaphore_mem>>
    %3 = tpu.memref_squeeze %2 : memref<1x!tpu.dma_semaphore, #tpu.memory_space<semaphore_mem>> -> memref<!tpu.dma_semaphore, #tpu.memory_space<semaphore_mem>>
    tpu.wait_dma2 semaphore(%3 : memref<!tpu.dma_semaphore, #tpu.memory_space<semaphore_mem>>) src(%arg0 : memref<2x4x16x16xf32, #tpu.memory_space<any>>) dst(%arg1 : memref<2x4x16x16xf32, #tpu.memory_space<any>>)
    return
  }
}

</mosaic_0001>

<llo_original>
// kernel: tpu_custom_call.1
$region0: #{tpu_custom_call.1}
  #allocation0 [shape = 'u32[]', space=smem, size = 0x4, offset = 0x4, fixed_abs, tag = 'smem constant byte address 0x4 - core index']
  #allocation1 [shape = 'u32[72,128]{1,0:T(1,128)}', space=vmem, size = 0x9000, scoped, tag = 'internal scratch']
  #allocation2 [shape = 's32[1]{0}', space=sflag, size = 0x4, scoped, tag = 'scratch operand']
  #allocation3 [shape = 's32[]', space=sflag, size = 0x4, offset = 0, fixed_abs, tag = 'sflag constant byte address 0x0 - dummy sync flag']
  #allocation4 [shape = 'u32[0]{0}', space=smem, size = 0, offset = 0, fixed_abs, tag = 'smem constant byte address 0x0 - null']
  %s0 = inlined_call_operand.hbm [shape: f32[2,4,16,16], index: 0, kind: input, shape index: {}]
  %s1 = inlined_call_operand.hbm [shape: f32[2,4,16,16], index: 1, kind: output, shape index: {}]
  %s2 = sld [smem:[#allocation0]]
  $region2: #{tpu_custom_call.1} parent=0
    _
  %s4 = ssub.s32 1, %s2
  %s5 = scalar_select 0, %s4, %s2
  %s7 = sshll.u32 1, 14
  %s8 = sxor.u32 4294967295, %s7
  %s10 = sshll.u32 %s0, 4
  %s11 = int_to_ptr.hbm [resolvable:$true] %s10
  %s12 = sshll.u32 %s1, 4
  %s13 = int_to_ptr.hbm [resolvable:$true] %s12
  %16 = dma.general %s11, 2048, %s13, [#allocation2], [#allocation3], [#allocation4], 0, 0
  %s17 = smul.u32 2, 4
  %s18 = smul.u32 %s17, 16
  %s19 = smul.u32 %s18, 1
  %s20 = sshll.u32 %s19, 4
  %21 = dma.done [#allocation2], %s20
  %22 = vsyncmov [#allocation2]
  %s23 = vpop.sfrf %22
  %p24 = scmp.eq.s32.totalorder %s23, 0
  %p25 = pneg %p24
  %27 = shalt.err (%p25)

</llo_original>
